<compile_context>
chip_gen: v5e
topology: v5e:2x2
jax: 0.10.0
libtpu: 0.0.40
codegen_flags: <defaults>
</compile_context>

<pallas_src>
import functools

import jax
import jax.numpy as jnp
from jax.experimental import pallas as pl
from jax.experimental.pallas import tpu as pltpu


def actor_critic_kernel(x_ref, w1_ref, w2_ref, w3_ref, b_ref, out_ref, *, action_dim):
    """Fused actor+critic MLP on a (tb, S) batch tile.

    Packed lanes after layer 3: [0:A) actor logits, [A] critic value, rest 0.
    Output slab: [0:A) softmax probs, [A] value, rest 0.
    """
    x = x_ref[...]

    b1 = b_ref[0:1, :]
    b2 = b_ref[1:2, :]
    b3 = b_ref[2:3, :]

    # layer 1: one matmul produces both actor and critic hidden states (128 lanes)
    h = jnp.tanh(jnp.dot(x, w1_ref[...], preferred_element_type=jnp.float32) + b1)
    # layer 2: block-diagonal (128,128)
    h = h.astype(w2_ref.dtype)
    h = jnp.tanh(jnp.dot(h, w2_ref[...], preferred_element_type=jnp.float32) + b2)
    # layer 3: block-diagonal, zero-padded to 128 output lanes
    h = h.astype(w3_ref.dtype)
    z = jnp.dot(h, w3_ref[...], preferred_element_type=jnp.float32) + b3

    # masked, numerically-stable softmax over the first `action_dim` lanes
    lane = jax.lax.broadcasted_iota(jnp.int32, z.shape, dimension=1)
    is_logit = lane < action_dim
    m = jnp.max(jnp.where(is_logit, z, -jnp.inf), axis=-1, keepdims=True)
    e = jnp.where(is_logit, jnp.exp(z - m), 0.0)
    denom = jnp.sum(e, axis=-1, keepdims=True)
    probs = e * pl.reciprocal(denom, approx=True)

    # single lane-dense store: [probs | value | zeros]
    out_ref[...] = jnp.where(is_logit, probs, jnp.where(lane == action_dim, z, 0.0))


def actor_critic_forward(x, packed, action_dim, *, tb=8, compute_dtype=jnp.float32):
    """x: (B, state_dim) f32. packed: (W1, W2, W3, biases) from pack_params.

    Returns (action_probs (B, action_dim), state_value (B, 1)), both f32.
    compute_dtype=jnp.bfloat16 puts MXU operands on the bf16 fast path
    (v6e / v7x); accumulation and all elementwise math stay in f32.
    """
    B, S = x.shape
    W1, W2, W3, biases = packed
    P = W3.shape[1]  # padded, lane-dense output width (128)

    xin = x.astype(compute_dtype)
    W1c = W1.astype(compute_dtype)
    W2c = W2.astype(compute_dtype)
    W3c = W3.astype(compute_dtype)

    kernel = functools.partial(actor_critic_kernel, action_dim=action_dim)

    out = pl.pallas_call(
        kernel,
        out_shape=jax.ShapeDtypeStruct((B, P), jnp.float32),
        grid_spec=pltpu.PrefetchScalarGridSpec(
            num_scalar_prefetch=0,
            grid=(pl.cdiv(B, tb),),
            in_specs=[
                pl.BlockSpec((tb, S), lambda i: (i, 0)),          # batch tile of x
                pl.BlockSpec(W1.shape, lambda i: (0, 0)),         # weights stay resident
                pl.BlockSpec(W2.shape, lambda i: (0, 0)),
                pl.BlockSpec(W3.shape, lambda i: (0, 0)),
                pl.BlockSpec(biases.shape, lambda i: (0, 0)),
            ],
            out_specs=pl.BlockSpec((tb, P), lambda i: (i, 0)),
        ),
        compiler_params=pltpu.CompilerParams(
            dimension_semantics=("parallel",),  # shards batch across v7x's 2 TCs
        ),
    )(xin, W1c, W2c, W3c, biases)

    probs = out[:, :action_dim]
    value = out[:, action_dim:action_dim + 1]
    return probs, value


def init_params(key, state_dim, action_dim, n_latent_var):
    """Deterministic synthetic init. Weights stored as (in, out) (PyTorch W.T)."""
    ks = jax.random.split(key, 12)

    def lin(kw, kb, fan_in, fan_out):
        bound = 1.0 / jnp.sqrt(jnp.float32(fan_in))
        w = jax.random.uniform(kw, (fan_in, fan_out), jnp.float32, -bound, bound)
        b = jax.random.uniform(kb, (1, fan_out), jnp.float32, -bound, bound)
        return w, b

    aw1, ab1 = lin(ks[0], ks[1], state_dim, n_latent_var)
    aw2, ab2 = lin(ks[2], ks[3], n_latent_var, n_latent_var)
    aw3, ab3 = lin(ks[4], ks[5], n_latent_var, action_dim)
    cw1, cb1 = lin(ks[6], ks[7], state_dim, n_latent_var)
    cw2, cb2 = lin(ks[8], ks[9], n_latent_var, n_latent_var)
    cw3, cb3 = lin(ks[10], ks[11], n_latent_var, 1)

    return dict(
        aw1=aw1, ab1=ab1, aw2=aw2, ab2=ab2, aw3=aw3, ab3=ab3,
        cw1=cw1, cb1=cb1, cw2=cw2, cb2=cb2, cw3=cw3, cb3=cb3,
    )


def pack_params(p, action_dim, hidden):
    """Pack per-layer actor/critic params into 3 fused weight slabs + 1 bias slab."""
    H = hidden
    P = 128  # lane-dense padded output width (>= action_dim + 1)
    assert 2 * H == P, "packing assumes 2 * n_latent_var == 128"
    assert action_dim + 1 <= P

    # layer 1: concatenated -> one shared matmul
    W1 = jnp.concatenate([p["aw1"], p["cw1"]], axis=1)                         # (S, 2H)
    # layer 2: block-diagonal
    W2 = jnp.zeros((2 * H, 2 * H), jnp.float32)
    W2 = W2.at[:H, :H].set(p["aw2"]).at[H:, H:].set(p["cw2"])                  # (2H, 2H)
    # layer 3: block-diagonal, zero-padded to 128 lanes
    W3 = jnp.zeros((2 * H, P), jnp.float32)
    W3 = W3.at[:H, :action_dim].set(p["aw3"])
    W3 = W3.at[H:, action_dim:action_dim + 1].set(p["cw3"])                    # (2H, P)

    b1 = jnp.concatenate([p["ab1"], p["cb1"]], axis=1)                         # (1, 2H)
    b2 = jnp.concatenate([p["ab2"], p["cb2"]], axis=1)                         # (1, 2H)
    b3 = jnp.concatenate(
        [p["ab3"], p["cb3"], jnp.zeros((1, P - action_dim - 1), jnp.float32)], axis=1
    )                                                                           # (1, P)
    biases = jnp.concatenate([b1, b2, b3], axis=0)                             # (3, P)
    return W1, W2, W3, biases


def reference_forward(x, p):
    """Pure-JAX reference mirroring the PyTorch nn.Sequential semantics."""
    h = jnp.tanh(x @ p["aw1"] + p["ab1"])
    h = jnp.tanh(h @ p["aw2"] + p["ab2"])
    probs = jax.nn.softmax(h @ p["aw3"] + p["ab3"], axis=-1)
    g = jnp.tanh(x @ p["cw1"] + p["cb1"])
    g = jnp.tanh(g @ p["cw2"] + p["cb2"])
    value = g @ p["cw3"] + p["cb3"]
    return probs, value


if __name__ == "__main__":
    # small shapes consistent with the module: state_dim=32, hidden=64, actions=16
    B, STATE_DIM, ACTION_DIM, N_LATENT = 32, 32, 16, 64

    key = jax.random.PRNGKey(0)
    k_x, k_p = jax.random.split(key)
    x = jax.random.normal(k_x, (B, STATE_DIM), dtype=jnp.float32)
    params = init_params(k_p, STATE_DIM, ACTION_DIM, N_LATENT)
    packed = pack_params(params, ACTION_DIM, N_LATENT)

    # f32 path (works on v5e/v6e/v7x)
    probs, value = actor_critic_forward(x, packed, ACTION_DIM, tb=8)
    probs = jax.block_until_ready(probs)
    value = jax.block_until_ready(value)

    ref_probs, ref_value = reference_forward(x, params)
    assert probs.shape == (B, ACTION_DIM) and value.shape == (B, 1)
    assert jnp.allclose(value, ref_value, atol=1e-4, rtol=1e-4)
    # approx reciprocal in softmax -> loosened tolerance per perf review
    assert jnp.allclose(probs, ref_probs, atol=1e-2)
    assert jnp.allclose(jnp.sum(probs, axis=-1), 1.0, atol=1e-2)

    # bf16 MXU-operand path for v6e / v7x (f32 accumulation + f32 elementwise)
    probs_bf, value_bf = actor_critic_forward(
        x, packed, ACTION_DIM, tb=8, compute_dtype=jnp.bfloat16
    )
    probs_bf = jax.block_until_ready(probs_bf)
    value_bf = jax.block_until_ready(value_bf)
    assert jnp.allclose(probs_bf, ref_probs, atol=1e-1)
    assert jnp.allclose(value_bf, ref_value, atol=1e-1)

    # TODO(synk): torch.multinomial / Categorical sampling in act() is host-side
    # stochastic sampling, not part of the network forward pass; not kernelized.
    print("KERNEL_OK")
</pallas_src>

<mosaic_0001>
module attributes {stable_mosaic.version = 11 : i64} {
  func.func @actor_critic_kernel(%arg0: i32, %arg1: memref<8x32xf32, #tpu.memory_space<vmem>>, %arg2: memref<32x128xf32, #tpu.memory_space<vmem>>, %arg3: memref<128x128xf32, #tpu.memory_space<vmem>>, %arg4: memref<128x128xf32, #tpu.memory_space<vmem>>, %arg5: memref<3x128xf32, #tpu.memory_space<vmem>>, %arg6: memref<8x128xf32, #tpu.memory_space<vmem>>) attributes {dimension_semantics = [#tpu.dimension_semantics<parallel>], iteration_bounds = array<i64: 4>, scalar_prefetch = 0 : i64, scratch_operands = 0 : i64, tpu.core_type = #tpu.core_type<tc>, window_params = [{transform_indices = @transform_0, window_bounds = array<i64: 8, 32>}, {pipeline_mode = #tpu.pipeline_mode<synchronous>, transform_indices = @transform_1, window_bounds = array<i64: 32, 128>}, {pipeline_mode = #tpu.pipeline_mode<synchronous>, transform_indices = @transform_2, window_bounds = array<i64: 128, 128>}, {pipeline_mode = #tpu.pipeline_mode<synchronous>, transform_indices = @transform_3, window_bounds = array<i64: 128, 128>}, {pipeline_mode = #tpu.pipeline_mode<synchronous>, transform_indices = @transform_4, window_bounds = array<i64: 3, 128>}, {transform_indices = @transform_5, window_bounds = array<i64: 8, 128>}]} {
    %c0 = arith.constant 0 : index
    %c0_0 = arith.constant 0 : index
    %0 = vector.load %arg1[%c0, %c0_0] : memref<8x32xf32, #tpu.memory_space<vmem>>, vector<8x32xf32>
    %c0_1 = arith.constant 0 : index
    %c0_2 = arith.constant 0 : index
    %1 = vector.load %arg5[%c0_1, %c0_2] : memref<3x128xf32, #tpu.memory_space<vmem>>, vector<1x128xf32>
    %c1 = arith.constant 1 : index
    %c0_3 = arith.constant 0 : index
    %2 = vector.load %arg5[%c1, %c0_3] : memref<3x128xf32, #tpu.memory_space<vmem>>, vector<1x128xf32>
    %c2 = arith.constant 2 : index
    %c0_4 = arith.constant 0 : index
    %3 = vector.load %arg5[%c2, %c0_4] : memref<3x128xf32, #tpu.memory_space<vmem>>, vector<1x128xf32>
    %c0_5 = arith.constant 0 : index
    %c0_6 = arith.constant 0 : index
    %4 = vector.load %arg2[%c0_5, %c0_6] : memref<32x128xf32, #tpu.memory_space<vmem>>, vector<32x128xf32>
    %cst = arith.constant dense<0.000000e+00> : vector<8x128xf32>
    %5 = tpu.matmul %0, %4, %cst {dimension_numbers = #tpu.dot_dimension_numbers<[1], [0], [0], [1], [0, 0, 1, 1], [], []>} : vector<8x32xf32>, vector<32x128xf32>, vector<8x128xf32> -> vector<8x128xf32>
    %6 = vector.broadcast %1 : vector<1x128xf32> to vector<8x128xf32>
    %7 = arith.addf %5, %6 : vector<8x128xf32>
    %8 = math.tanh %7 : vector<8x128xf32>
    %c0_7 = arith.constant 0 : index
    %c0_8 = arith.constant 0 : index
    %9 = vector.load %arg3[%c0_7, %c0_8] : memref<128x128xf32, #tpu.memory_space<vmem>>, vector<128x128xf32>
    %cst_9 = arith.constant dense<0.000000e+00> : vector<8x128xf32>
    %10 = tpu.matmul %8, %9, %cst_9 {dimension_numbers = #tpu.dot_dimension_numbers<[1], [0], [0], [1], [0, 0, 1, 1], [], []>} : vector<8x128xf32>, vector<128x128xf32>, vector<8x128xf32> -> vector<8x128xf32>
    %11 = vector.broadcast %2 : vector<1x128xf32> to vector<8x128xf32>
    %12 = arith.addf %10, %11 : vector<8x128xf32>
    %13 = math.tanh %12 : vector<8x128xf32>
    %c0_10 = arith.constant 0 : index
    %c0_11 = arith.constant 0 : index
    %14 = vector.load %arg4[%c0_10, %c0_11] : memref<128x128xf32, #tpu.memory_space<vmem>>, vector<128x128xf32>
    %cst_12 = arith.constant dense<0.000000e+00> : vector<8x128xf32>
    %15 = tpu.matmul %13, %14, %cst_12 {dimension_numbers = #tpu.dot_dimension_numbers<[1], [0], [0], [1], [0, 0, 1, 1], [], []>} : vector<8x128xf32>, vector<128x128xf32>, vector<8x128xf32> -> vector<8x128xf32>
    %16 = vector.broadcast %3 : vector<1x128xf32> to vector<8x128xf32>
    %17 = arith.addf %15, %16 : vector<8x128xf32>
    %18 = tpu.iota {dimensions = array<i32: 1>} : vector<8x128xi32>
    %c16_i32 = arith.constant 16 : i32
    %19 = vector.broadcast %c16_i32 : i32 to vector<8x128xi32>
    %20 = arith.cmpi slt, %18, %19 : vector<8x128xi32>
    %cst_13 = arith.constant 0xFF800000 : f32
    %21 = vector.broadcast %cst_13 : f32 to vector<8x128xf32>
    %22 = arith.select %20, %17, %21 : vector<8x128xi1>, vector<8x128xf32>
    %cst_14 = arith.constant dense<0xFF800000> : vector<8xf32>
    %23 = vector.multi_reduction <maximumf>, %22, %cst_14 [1] : vector<8x128xf32> to vector<8xf32>
    %24 = vector.shape_cast %23 : vector<8xf32> to vector<8x1xf32>
    %25 = vector.broadcast %24 : vector<8x1xf32> to vector<8x128xf32>
    %26 = arith.subf %17, %25 : vector<8x128xf32>
    %27 = math.exp %26 : vector<8x128xf32>
    %cst_15 = arith.constant 0.000000e+00 : f32
    %28 = vector.broadcast %cst_15 : f32 to vector<8x128xf32>
    %29 = arith.select %20, %27, %28 : vector<8x128xi1>, vector<8x128xf32>
    %cst_16 = arith.constant dense<0.000000e+00> : vector<8xf32>
    %30 = vector.multi_reduction <add>, %29, %cst_16 [1] : vector<8x128xf32> to vector<8xf32>
    %31 = vector.shape_cast %30 : vector<8xf32> to vector<8x1xf32>
    %32 = tpu.reciprocal %31 {approx = true} : vector<8x1xf32> -> vector<8x1xf32>
    %33 = vector.broadcast %32 : vector<8x1xf32> to vector<8x128xf32>
    %34 = arith.mulf %29, %33 : vector<8x128xf32>
    %c16_i32_17 = arith.constant 16 : i32
    %35 = vector.broadcast %c16_i32_17 : i32 to vector<8x128xi32>
    %36 = arith.cmpi eq, %18, %35 : vector<8x128xi32>
    %cst_18 = arith.constant 0.000000e+00 : f32
    %37 = vector.broadcast %cst_18 : f32 to vector<8x128xf32>
    %38 = arith.select %36, %17, %37 : vector<8x128xi1>, vector<8x128xf32>
    %39 = arith.select %20, %34, %38 : vector<8x128xi1>, vector<8x128xf32>
    %c0_19 = arith.constant 0 : index
    %c0_20 = arith.constant 0 : index
    %40 = vector.load %arg6[%c0_19, %c0_20] : memref<8x128xf32, #tpu.memory_space<vmem>>, vector<8x128xf32>
    tpu.vector_store %arg6[%c0_19, %c0_20], %39 {strides = array<i32>} : memref<8x128xf32, #tpu.memory_space<vmem>>, vector<8x128xf32>,
    return
  }
  func.func @transform_0(%arg0: i32) -> (i32, i32) {
    %c0_i32 = arith.constant 0 : i32
    %c0_i32_0 = arith.constant 0 : i32
    return %arg0, %c0_i32 : i32, i32
  }
  func.func @transform_1(%arg0: i32) -> (i32, i32) {
    %c0_i32 = arith.constant 0 : i32
    %c0_i32_0 = arith.constant 0 : i32
    %c0_i32_1 = arith.constant 0 : i32
    return %c0_i32, %c0_i32_0 : i32, i32
  }
  func.func @transform_2(%arg0: i32) -> (i32, i32) {
    %c0_i32 = arith.constant 0 : i32
    %c0_i32_0 = arith.constant 0 : i32
    %c0_i32_1 = arith.constant 0 : i32
    return %c0_i32, %c0_i32_0 : i32, i32
  }
  func.func @transform_3(%arg0: i32) -> (i32, i32) {
    %c0_i32 = arith.constant 0 : i32
    %c0_i32_0 = arith.constant 0 : i32
    %c0_i32_1 = arith.constant 0 : i32
    return %c0_i32, %c0_i32_0 : i32, i32
  }
  func.func @transform_4(%arg0: i32) -> (i32, i32) {
    %c0_i32 = arith.constant 0 : i32
    %c0_i32_0 = arith.constant 0 : i32
    %c0_i32_1 = arith.constant 0 : i32
    return %c0_i32, %c0_i32_0 : i32, i32
  }
  func.func @transform_5(%arg0: i32) -> (i32, i32) {
    %c0_i32 = arith.constant 0 : i32
    %c0_i32_0 = arith.constant 0 : i32
    return %arg0, %c0_i32 : i32, i32
  }
}

</mosaic_0001>

<llo_original>
// kernel: tpu_custom_call.1
$region0: #{tpu_custom_call.1}
  #allocation0 [shape = 'u32[]', space=smem, size = 0x4, offset = 0x4, fixed_abs, tag = 'smem constant byte address 0x4 - core index']
  #allocation1 [shape = 'u32[72,128]{1,0:T(1,128)}', space=vmem, size = 0x9000, scoped, tag = 'internal scratch']
  %s0 = inlined_call_operand.hbm [shape: f32[32,32], index: 0, kind: input, shape index: {}]
  %s1 = inlined_call_operand.hbm [shape: f32[32,128], index: 1, kind: input, shape index: {}]
  %s2 = inlined_call_operand.hbm [shape: f32[128,128], index: 2, kind: input, shape index: {}]
  %s3 = inlined_call_operand.hbm [shape: f32[128,128], index: 3, kind: input, shape index: {}]
  %s4 = inlined_call_operand.hbm [shape: f32[3,128], index: 4, kind: input, shape index: {}]
  %s5 = inlined_call_operand.hbm [shape: f32[32,128], index: 5, kind: output, shape index: {}]
  %s6 = sld [smem:[#allocation0]]
  $region73: #{tpu_custom_call.1} parent=0
    _
  %s8 = ssub.s32 1, %s6
  %s9 = scalar_select 0, %s8, %s6
  $region1: #{tpu_custom_call.1} parent=0
    #allocation2 [shape = 'u8[8192]{0}', space=vmem, size = 0x2000, scoped, tag = 'input window, operand 0']
    #allocation3 [shape = 's32[2]{0}', space=sflag, size = 0x8, scoped, tag = 'scoped memory for tpu_custom_call.1']
    #allocation4 [shape = 's32[2]{0}', space=sflag, size = 0x8, scoped, tag = 'scoped memory for tpu_custom_call.1']
    #allocation5 [shape = 'u8[16384]{0}', space=vmem, size = 0x4000, scoped, tag = 'input window, operand 1, single buffered']
    #allocation6 [shape = 's32[1]{0}', space=sflag, size = 0x4, scoped, tag = 'scoped memory for tpu_custom_call.1']
    #allocation7 [shape = 'u8[65536]{0}', space=vmem, size = 0x10000, scoped, tag = 'input window, operand 2, single buffered']
    #allocation8 [shape = 'u8[65536]{0}', space=vmem, size = 0x10000, scoped, tag = 'input window, operand 3, single buffered']
    #allocation9 [shape = 's32[1]{0}', space=sflag, size = 0x4, scoped, tag = 'scoped memory for tpu_custom_call.1']
    #allocation10 [shape = 'u8[2048]{0}', space=vmem, size = 0x800, scoped, tag = 'input window, operand 4, single buffered']
    #allocation11 [shape = 'u8[8192]{0}', space=vmem, size = 0x2000, scoped, tag = 'output window, operand 0']
    %10 = vsyncpa [#allocation3], 0
    %s11 = scalar_lea.sflag [#allocation3], 1
    %12 = vsyncpa %s11, 0
    %13 = vsyncpa [#allocation6], 0
    %14 = vsyncpa [#allocation9], 0
    %15 = vsyncpa [#allocation4], 0
    %s16 = scalar_lea.sflag [#allocation4], 1
    %17 = vsyncpa %s16, 0
    loop: start=0, step=1, limit=6
    $region2: #{tpu_custom_call.1} parent=1 // loop_pre_header
      _
    $region3: #{tpu_custom_call.1} parent=1 // loop_header
      %s19 = sphi 0, %s23
      %p20 = scmp.ge.s32.totalorder %s19, 6
      %s29 = sphi 0, %s31
      %s32 = sphi 0, %s29
      %s33 = sphi 0, %s32
      %s49 = sphi 0, %s33
      %s53 = sphi 0, %s53
      %s55 = sphi 0, %s53
      %s56 = sphi 0, %s55
      %s70 = sphi 0, %s56
      %s74 = sphi 0, %s74
      %s76 = sphi 0, %s74
      %s77 = sphi 0, %s76
      %s91 = sphi 0, %s77
      %s95 = sphi 0, %s95
      %s97 = sphi 0, %s95
      %s98 = sphi 0, %s97
      %s112 = sphi 0, %s98
      %s116 = sphi 0, %s116
      %s118 = sphi 0, %s116
      %s119 = sphi 0, %s118
      %s133 = sphi 0, %s119
      %s139 = sphi 0, %s141
      %s142 = sphi 0, %s139
      %s143 = sphi 0, %s142
      %s159 = sphi 0, %s143
    $region4: #{tpu_custom_call.1} parent=1 // loop_header_branch
      %22 = sbr.rel (%p20) target = $region8
    $region5: #{tpu_custom_call.1} parent=1 // loop_body
      %s24 = ssub.s32 %s19, 1
      %s25 = ssub.s32 %s19, 2
      %s26 = sadd.s32 %s19, 1
      %s27 = ssub.s32 %s19, %s26
      %p28 = scmp.eq.s32.totalorder %s27, 0
      %s30 = sadd.s32 %s29, 1
      %s31 = scalar_select %p28, %s29, %s30
      %p34 = pneg %p28
      %p35 = scmp.eq.s32.totalorder %s19, 3
      %p36 = por %p34, %p35
      %p37 = scmp.ne.s32.totalorder %s29, %s32
      %p38 = scmp.eq.s32.totalorder %s19, 0
      %p39 = por %p37, %p38
      %p40 = scmp.ne.s32.totalorder %s29, %s32
      %p41 = scmp.eq.s32.totalorder %s24, 3
      %p42 = por %p40, %p41
      %p43 = scmp.ne.s32.totalorder %s32, %s33
      %p44 = scmp.eq.s32.totalorder %s24, 0
      %p45 = por %p43, %p44
      %p46 = scmp.ne.s32.totalorder %s32, %s33
      %p47 = scmp.eq.s32.totalorder %s25, 3
      %p48 = por %p46, %p47
      %p50 = scmp.ne.s32.totalorder %s33, %s49
      %p51 = scmp.eq.s32.totalorder %s25, 0
      %p52 = por %p50, %p51
      %s54 = sadd.s32 %s53, 1
      %p57 = scmp.eq.s32.totalorder %s19, 3
      %p58 = scmp.ne.s32.totalorder %s53, %s55
      %p59 = scmp.eq.s32.totalorder %s19, 0
      %p60 = por %p58, %p59
      %p61 = scmp.ne.s32.totalorder %s53, %s55
      %p62 = scmp.eq.s32.totalorder %s24, 3
      %p63 = por %p61, %p62
      %p64 = scmp.ne.s32.totalorder %s55, %s56
      %p65 = scmp.eq.s32.totalorder %s24, 0
      %p66 = por %p64, %p65
      %p67 = scmp.ne.s32.totalorder %s55, %s56
      %p68 = scmp.eq.s32.totalorder %s25, 3
      %p69 = por %p67, %p68
      %p71 = scmp.ne.s32.totalorder %s56, %s70
      %p72 = scmp.eq.s32.totalorder %s25, 0
      %p73 = por %p71, %p72
      %s75 = sadd.s32 %s74, 1
      %p78 = scmp.eq.s32.totalorder %s19, 3
      %p79 = scmp.ne.s32.totalorder %s74, %s76
      %p80 = scmp.eq.s32.totalorder %s19, 0
      %p81 = por %p79, %p80
      %p82 = scmp.ne.s32.totalorder %s74, %s76
      %p83 = scmp.eq.s32.totalorder %s24, 3
      %p84 = por %p82, %p83
      %p85 = scmp.ne.s32.totalorder %s76, %s77
      %p86 = scmp.eq.s32.totalorder %s24, 0
      %p87 = por %p85, %p86
      %p88 = scmp.ne.s32.totalorder %s76, %s77
      %p89 = scmp.eq.s32.totalorder %s25, 3
      %p90 = por %p88, %p89
      %p92 = scmp.ne.s32.totalorder %s77, %s91
      %p93 = scmp.eq.s32.totalorder %s25, 0
      %p94 = por %p92, %p93
      %s96 = sadd.s32 %s95, 1
      %p99 = scmp.eq.s32.totalorder %s19, 3
      %p100 = scmp.ne.s32.totalorder %s95, %s97
      %p101 = scmp.eq.s32.totalorder %s19, 0
      %p102 = por %p100, %p101
      %p103 = scmp.ne.s32.totalorder %s95, %s97
      %p104 = scmp.eq.s32.totalorder %s24, 3
      %p105 = por %p103, %p104
      %p106 = scmp.ne.s32.totalorder %s97, %s98
      %p107 = scmp.eq.s32.totalorder %s24, 0
      %p108 = por %p106, %p107
      %p109 = scmp.ne.s32.totalorder %s97, %s98
      %p110 = scmp.eq.s32.totalorder %s25, 3
      %p111 = por %p109, %p110
      %p113 = scmp.ne.s32.totalorder %s98, %s112
      %p114 = scmp.eq.s32.totalorder %s25, 0
      %p115 = por %p113, %p114
      %s117 = sadd.s32 %s116, 1
      %p120 = scmp.eq.s32.totalorder %s19, 3
      %p121 = scmp.ne.s32.totalorder %s116, %s118
      %p122 = scmp.eq.s32.totalorder %s19, 0
      %p123 = por %p121, %p122
      %p124 = scmp.ne.s32.totalorder %s116, %s118
      %p125 = scmp.eq.s32.totalorder %s24, 3
      %p126 = por %p124, %p125
      %p127 = scmp.ne.s32.totalorder %s118, %s119
      %p128 = scmp.eq.s32.totalorder %s24, 0
      %p129 = por %p127, %p128
      %p130 = scmp.ne.s32.totalorder %s118, %s119
      %p131 = scmp.eq.s32.totalorder %s25, 3
      %p132 = por %p130, %p131
      %p134 = scmp.ne.s32.totalorder %s119, %s133
      %p135 = scmp.eq.s32.totalorder %s25, 0
      %p136 = por %p134, %p135
      %s137 = ssub.s32 %s19, %s26
      %p138 = scmp.eq.s32.totalorder %s137, 0
      %s140 = sadd.s32 %s139, 1
      %s141 = scalar_select %p138, %s139, %s140
      %p144 = pneg %p138
      %p145 = scmp.eq.s32.totalorder %s19, 3
      %p146 = por %p144, %p145
      %p147 = scmp.ne.s32.totalorder %s139, %s142
      %p148 = scmp.eq.s32.totalorder %s19, 0
      %p149 = por %p147, %p148
      %p150 = scmp.ne.s32.totalorder %s139, %s142
      %p151 = scmp.eq.s32.totalorder %s24, 3
      %p152 = por %p150, %p151
      %p153 = scmp.ne.s32.totalorder %s142, %s143
      %p154 = scmp.eq.s32.totalorder %s24, 0
      %p155 = por %p153, %p154
      %p156 = scmp.ne.s32.totalorder %s142, %s143
      %p157 = scmp.eq.s32.totalorder %s25, 3
      %p158 = por %p156, %p157
      %p160 = scmp.ne.s32.totalorder %s143, %s159
      %p161 = scmp.eq.s32.totalorder %s25, 0
      %p162 = por %p160, %p161
      %p163 = scmp.le.s32.totalorder 1, %s19
      %p164 = scmp.lt.s32.totalorder %s19, 5
      %p165 = pnand %p163, %p164
      %p166 = pneg %p165
      // Predicated region
      $region9: #{tpu_custom_call.1} parent=5 // pred_check
        _
      $region10: #{tpu_custom_call.1} parent=5 // pred_check_branch
        %168 = sbr.rel (%p165) target = $region12
      $region11: #{tpu_custom_call.1} parent=5 // pred_region
        %s169 = ssub.s32 %s19, 1
        // Predicated region
        $region13: #{tpu_custom_call.1} parent=11 // pred_check
          %p170 = pneg %p66
        $region14: #{tpu_custom_call.1} parent=11 // pred_check_branch
          %172 = sbr.rel (%p170) target = $region16
        $region15: #{tpu_custom_call.1} parent=11 // pred_region
          %174 = vsyncadd [#allocation6], 0
          %s175 = sshll.u32 %s1, 4
          %s176 = int_to_ptr.hbm [resolvable:$true] %s175
          %s177 = sshll.u32 [#allocation5], 4
          %s178 = int_to_ptr.vmem [resolvable:$true] %s177
          %183 = dma.hbm_to_vmem [thread:$0]  %s176, 512, %s178, [#allocation6], 128, 128, 8
        $region16: #{tpu_custom_call.1} parent=11 // pred_fallthru
          _
        // Predicated region
        $region17: #{tpu_custom_call.1} parent=11 // pred_check
          %p184 = pneg %p87
        $region18: #{tpu_custom_call.1} parent=11 // pred_check_branch
          %186 = sbr.rel (%p184) target = $region20
        $region19: #{tpu_custom_call.1} parent=11 // pred_region
          %188 = vsyncadd [#allocation6], 0
          %s189 = sshll.u32 %s2, 4
          %s190 = int_to_ptr.hbm [resolvable:$true] %s189
          %s191 = sshll.u32 [#allocation7], 4
          %s192 = int_to_ptr.vmem [resolvable:$true] %s191
          %197 = dma.hbm_to_vmem [thread:$0]  %s190, 2048, %s192, [#allocation6], 128, 128, 8
        $region20: #{tpu_custom_call.1} parent=11 // pred_fallthru
          _
        // Predicated region
        $region21: #{tpu_custom_call.1} parent=11 // pred_check
          %p198 = pneg %p108
        $region22: #{tpu_custom_call.1} parent=11 // pred_check_branch
          %200 = sbr.rel (%p198) target = $region24
        $region23: #{tpu_custom_call.1} parent=11 // pred_region
          %202 = vsyncadd [#allocation9], 0
          %s203 = sshll.u32 %s3, 4
          %s204 = int_to_ptr.hbm [resolvable:$true] %s203
          %s205 = sshll.u32 [#allocation8], 4
          %s206 = int_to_ptr.vmem [resolvable:$true] %s205
          %211 = dma.hbm_to_vmem [thread:$0]  %s204, 2048, %s206, [#allocation9], 128, 128, 8
        $region24: #{tpu_custom_call.1} parent=11 // pred_fallthru
          _
        // Predicated region
        $region25: #{tpu_custom_call.1} parent=11 // pred_check
          %p212 = pneg %p129
        $region26: #{tpu_custom_call.1} parent=11 // pred_check_branch
          %214 = sbr.rel (%p212) target = $region28
        $region27: #{tpu_custom_call.1} parent=11 // pred_region
          %216 = vsyncadd [#allocation9], 0
          %s218 = sshll.u32 %s4, 4
          %s219 = int_to_ptr.hbm [resolvable:$true] %s218
          %s220 = sshll.u32 [#allocation10], 4
          %s221 = int_to_ptr.vmem [resolvable:$true] %s220
          %223 = dma.hbm_to_vmem [thread:$0]  %s219, 64, %s221, [#allocation9]
        $region28: #{tpu_custom_call.1} parent=11 // pred_fallthru
          _
      $region12: #{tpu_custom_call.1} parent=5 // pred_fallthru
        _
      %p224 = scmp.lt.s32.totalorder %s19, 4
      // Predicated region
      $region29: #{tpu_custom_call.1} parent=5 // pred_check
        %p225 = pneg %p224
      $region30: #{tpu_custom_call.1} parent=5 // pred_check_branch
        %227 = sbr.rel (%p225) target = $region32
      $region31: #{tpu_custom_call.1} parent=5 // pred_region
        // Predicated region
        $region33: #{tpu_custom_call.1} parent=31 // pred_check
          %p228 = pneg %p39
        $region34: #{tpu_custom_call.1} parent=31 // pred_check_branch
          %230 = sbr.rel (%p228) target = $region36
        $region35: #{tpu_custom_call.1} parent=31 // pred_region
          %s231 = sand.u32 %s29, 1
          %s232 = scalar_lea.sflag [#allocation3], %s231
          %s233 = sand.u32 %s29, 1
          %s234 = smul.addr %s233, 8
          %s235 = scalar_lea.vmem [#allocation2], %s234
          %237 = vsyncadd %s232, 0
          %s238 = smul.addr %s19, 8
          %s239 = scalar_lea.hbm %s0, %s238
          %s241 = sshll.u32 %s239, 4
          %s242 = int_to_ptr.hbm [resolvable:$true] %s241
          %s243 = sshll.u32 %s235, 4
          %s244 = int_to_ptr.vmem [resolvable:$true] %s243
          %246 = dma.hbm_to_vmem [thread:$0]  %s242, 128, %s244, %s232
        $region36: #{tpu_custom_call.1} parent=31 // pred_fallthru
          _
      $region32: #{tpu_custom_call.1} parent=5 // pred_fallthru
        _
      %p247 = scmp.le.s32.totalorder 1, %s19
      %p248 = scmp.lt.s32.totalorder %s19, 5
      %p249 = pnand %p247, %p248
      %p250 = pneg %p249
      // Predicated region
      $region37: #{tpu_custom_call.1} parent=5 // pred_check
        _
      $region38: #{tpu_custom_call.1} parent=5 // pred_check_branch
        %252 = sbr.rel (%p249) target = $region40
      $region39: #{tpu_custom_call.1} parent=5 // pred_region
        %s253 = ssub.s32 %s19, 1
        %s254 = sand.u32 %s32, 1
        %s255 = scalar_lea.sflag [#allocation3], %s254
        %s256 = sand.u32 %s32, 1
        %s257 = smul.addr %s256, 8
        %s258 = scalar_lea.vmem [#allocation2], %s257
        // Predicated region
        $region41: #{tpu_custom_call.1} parent=39 // pred_check
          %p259 = pneg %p45
        $region42: #{tpu_custom_call.1} parent=39 // pred_check_branch
          %261 = sbr.rel (%p259) target = $region44
        $region43: #{tpu_custom_call.1} parent=39 // pred_region
          %263 = dma.done %s255, 128
        $region44: #{tpu_custom_call.1} parent=39 // pred_fallthru
          _
        // Predicated region
        $region45: #{tpu_custom_call.1} parent=39 // pred_check
          %p264 = pneg %p66
        $region46: #{tpu_custom_call.1} parent=39 // pred_check_branch
          %266 = sbr.rel (%p264) target = $region48
        $region47: #{tpu_custom_call.1} parent=39 // pred_region
          %268 = dma.done [#allocation6], 512
        $region48: #{tpu_custom_call.1} parent=39 // pred_fallthru
          _
        // Predicated region
        $region49: #{tpu_custom_call.1} parent=39 // pred_check
          %p269 = pneg %p87
        $region50: #{tpu_custom_call.1} parent=39 // pred_check_branch
          %271 = sbr.rel (%p269) target = $region52
        $region51: #{tpu_custom_call.1} parent=39 // pred_region
          %273 = dma.done [#allocation6], 2048
        $region52: #{tpu_custom_call.1} parent=39 // pred_fallthru
          _
        // Predicated region
        $region53: #{tpu_custom_call.1} parent=39 // pred_check
          %p274 = pneg %p108
        $region54: #{tpu_custom_call.1} parent=39 // pred_check_branch
          %276 = sbr.rel (%p274) target = $region56
        $region55: #{tpu_custom_call.1} parent=39 // pred_region
          %278 = dma.done [#allocation9], 2048
        $region56: #{tpu_custom_call.1} parent=39 // pred_fallthru
          _
        // Predicated region
        $region57: #{tpu_custom_call.1} parent=39 // pred_check
          %p279 = pneg %p129
        $region58: #{tpu_custom_call.1} parent=39 // pred_check_branch
          %281 = sbr.rel (%p279) target = $region60
        $region59: #{tpu_custom_call.1} parent=39 // pred_region
          %283 = dma.done [#allocation9], 64
        $region60: #{tpu_custom_call.1} parent=39 // pred_fallthru
          _
        %s284 = sand.u32 %s32, 1
        %s285 = scalar_lea.sflag [#allocation3], %s284
        %s286 = sand.u32 %s32, 1
        %s287 = smul.addr %s286, 8
        %s288 = scalar_lea.vmem [#allocation2], %s287
        %p289 = pneg %p45
        %p290 = pneg %p42
        %p291 = pneg %p66
        %p292 = pneg %p63
        %p293 = pneg %p87
        %p294 = pneg %p84
        %p295 = pneg %p108
        %p296 = pneg %p105
        %p297 = pneg %p129
        %p298 = pneg %p126
        %p299 = pneg %p155
        %p300 = pneg %p152
        %s301 = sand.u32 %s142, 1
        %s302 = scalar_lea.sflag [#allocation4], %s301
        %s303 = sand.u32 %s142, 1
        %s304 = smul.addr %s303, 8
        %s305 = scalar_lea.vmem [#allocation11], %s304
        %v306 = vld [vmem:[%s258] sm:$0xff]
        %v307 = vld [vmem:[#allocation10] sm:$0x1]
        %v308 = vld [vmem:[#allocation10 + $0x1] sm:$0x1]
        %v309 = vld [vmem:[#allocation10 + $0x2] sm:$0x1]
        %v310 = vld [vmem:[#allocation5] sm:$0xff]
        %v311 = vld [vmem:[#allocation5 + $0x8] sm:$0xff]
        %v312 = vld [vmem:[#allocation5 + $0x10] sm:$0xff]
        %v313 = vld [vmem:[#allocation5 + $0x18] sm:$0xff]
        %v314 = vperm.slane %v307, 0
        %vm315 = vcmask 261120
        %v317 = vsel %vm315, %v306, 0
        %319 = vmatpush.msra.mxu0 0.0
        %320 = vmatpush.msra.mxu0 0.0
        %321 = vmatpush.msra.mxu0 0.0
        %322 = vmatpush.msra.mxu0 0.0
        %323 = vmatpush.msra.mxu0 0.0
        %324 = vmatpush.msra.mxu0 0.0
        %325 = vmatpush.msra.mxu0 0.0
        %326 = vmatpush.msra.mxu0 0.0
        %327 = vmatpush.msra.mxu0 0.0
        %328 = vmatpush.msra.mxu0 0.0
        %329 = vmatpush.msra.mxu0 0.0
        %330 = vmatpush.msra.mxu0 0.0
        %331 = vmatpush.msra.mxu0 %v313
        %332 = vmatpush.msra.mxu0 %v312
        %333 = vmatpush.msra.mxu0 %v311
        %334 = vmatpush.msra.mxu0 %v310
        %335 = vmatmul.f32.gmra.mxu0 %v317
        %v336 = vpop.f32.mrf.mxu0
        %v337 = vadd.f32 %v314, %v336
        %338 = vdwg.mxu0
        %v339 = vtanh.pop %v337
        %v340 = vld [vmem:[#allocation7] sm:$0xff]
        %v341 = vld [vmem:[#allocation7 + $0x8] sm:$0xff]
        %v342 = vld [vmem:[#allocation7 + $0x10] sm:$0xff]
        %v343 = vld [vmem:[#allocation7 + $0x18] sm:$0xff]
        %v344 = vld [vmem:[#allocation7 + $0x20] sm:$0xff]
        %v345 = vld [vmem:[#allocation7 + $0x28] sm:$0xff]
        %v346 = vld [vmem:[#allocation7 + $0x30] sm:$0xff]
        %v347 = vld [vmem:[#allocation7 + $0x38] sm:$0xff]
        %v348 = vld [vmem:[#allocation7 + $0x40] sm:$0xff]
        %v349 = vld [vmem:[#allocation7 + $0x48] sm:$0xff]
        %v350 = vld [vmem:[#allocation7 + $0x50] sm:$0xff]
        %v351 = vld [vmem:[#allocation7 + $0x58] sm:$0xff]
        %v352 = vld [vmem:[#allocation7 + $0x60] sm:$0xff]
        %v353 = vld [vmem:[#allocation7 + $0x68] sm:$0xff]
        %v354 = vld [vmem:[#allocation7 + $0x70] sm:$0xff]
        %v355 = vld [vmem:[#allocation7 + $0x78] sm:$0xff]
        %v356 = vperm.slane %v308, 0
        %357 = vmatpush.msra.mxu0 %v355
        %358 = vmatpush.msra.mxu0 %v354
        %359 = vmatpush.msra.mxu0 %v353
        %360 = vmatpush.msra.mxu0 %v352
        %361 = vmatpush.msra.mxu0 %v351
        %362 = vmatpush.msra.mxu0 %v350
        %363 = vmatpush.msra.mxu0 %v349
        %364 = vmatpush.msra.mxu0 %v348
        %365 = vmatpush.msra.mxu0 %v347
        %366 = vmatpush.msra.mxu0 %v346
        %367 = vmatpush.msra.mxu0 %v345
        %368 = vmatpush.msra.mxu0 %v344
        %369 = vmatpush.msra.mxu0 %v343
        %370 = vmatpush.msra.mxu0 %v342
        %371 = vmatpush.msra.mxu0 %v341
        %372 = vmatpush.msra.mxu0 %v340
        %373 = vmatmul.f32.gmra.mxu0 %v339
        %v374 = vpop.f32.mrf.mxu0
        %v375 = vadd.f32 %v356, %v374
        %376 = vdwg.mxu0
        %v377 = vtanh.pop %v375
        %v378 = vld [vmem:[#allocation8] sm:$0xff]
        %v379 = vld [vmem:[#allocation8 + $0x8] sm:$0xff]
        %v380 = vld [vmem:[#allocation8 + $0x10] sm:$0xff]
        %v381 = vld [vmem:[#allocation8 + $0x18] sm:$0xff]
        %v382 = vld [vmem:[#allocation8 + $0x20] sm:$0xff]
        %v383 = vld [vmem:[#allocation8 + $0x28] sm:$0xff]
        %v384 = vld [vmem:[#allocation8 + $0x30] sm:$0xff]
        %v385 = vld [vmem:[#allocation8 + $0x38] sm:$0xff]
        %v386 = vld [vmem:[#allocation8 + $0x40] sm:$0xff]
        %v387 = vld [vmem:[#allocation8 + $0x48] sm:$0xff]
        %v388 = vld [vmem:[#allocation8 + $0x50] sm:$0xff]
        %v389 = vld [vmem:[#allocation8 + $0x58] sm:$0xff]
        %v390 = vld [vmem:[#allocation8 + $0x60] sm:$0xff]
        %v391 = vld [vmem:[#allocation8 + $0x68] sm:$0xff]
        %v392 = vld [vmem:[#allocation8 + $0x70] sm:$0xff]
        %v393 = vld [vmem:[#allocation8 + $0x78] sm:$0xff]
        %v394 = vperm.slane %v309, 0
        %395 = vmatpush.msra.mxu0 %v393
        %396 = vmatpush.msra.mxu0 %v392
        %397 = vmatpush.msra.mxu0 %v391
        %398 = vmatpush.msra.mxu0 %v390
        %399 = vmatpush.msra.mxu0 %v389
        %400 = vmatpush.msra.mxu0 %v388
        %401 = vmatpush.msra.mxu0 %v387
        %402 = vmatpush.msra.mxu0 %v386
        %403 = vmatpush.msra.mxu0 %v385
        %404 = vmatpush.msra.mxu0 %v384
        %405 = vmatpush.msra.mxu0 %v383
        %406 = vmatpush.msra.mxu0 %v382
        %407 = vmatpush.msra.mxu0 %v381
        %408 = vmatpush.msra.mxu0 %v380
        %409 = vmatpush.msra.mxu0 %v379
        %410 = vmatpush.msra.mxu0 %v378
        %411 = vmatmul.f32.gmra.mxu0 %v377
        %v412 = vpop.f32.mrf.mxu0
        %v413 = vadd.f32 %v394, %v412
        %414 = vdwg.mxu0
        %v415 = vlaneseq
        %v416 = vand.u32 %v415, 127
        %vm417 = vcmp.lt.s32.totalorder %v416, 16
        %v418 = vsel %vm417, %v413, -inf
        %419 = vmax.xlane.f32.xlu0 %v418
        %v420 = vpop.xlane.xlu0 %419
        %v421 = vsub.f32 %v413, %v420
        %v422 = vmul.f32 %v421, 1.442695
        %v423 = vpow.pop %v422
        %v424 = vsel %vm417, %v423, 0.0
        %425 = vadd.xlane.f32.xlu0 %v424
        %v426 = vpop.xlane.xlu0 %425
        %v427 = vrcp.pop %v426
        %v428 = vmul.f32 %v424, %v427
        %vm429 = vcmp.eq.s32.totalorder %v416, 16
        %v430 = vsel %vm429, %v413, 0.0
        %v431 = vsel %vm417, %v428, %v430
        %432 = vst [vmem:[%s305] sm:$0xff] %v431
        %s433 = sand.u32 %s142, 1
        %s434 = scalar_lea.sflag [#allocation4], %s433
        %s435 = sand.u32 %s142, 1
        %s436 = smul.addr %s435, 8
        %s437 = scalar_lea.vmem [#allocation11], %s436
        // Predicated region
        $region61: #{tpu_custom_call.1} parent=39 // pred_check
          %p438 = pneg %p152
        $region62: #{tpu_custom_call.1} parent=39 // pred_check_branch
          %440 = sbr.rel (%p438) target = $region64
        $region63: #{tpu_custom_call.1} parent=39 // pred_region
          %442 = vsyncadd %s434, 0
          %s443 = smul.addr %s24, 8
          %s444 = scalar_lea.hbm %s5, %s443
          %s446 = sshll.u32 %s437, 4
          %s447 = int_to_ptr.vmem [resolvable:$true] %s446
          %s448 = sshll.u32 %s444, 4
          %s449 = int_to_ptr.hbm [resolvable:$true] %s448
          %451 = dma.vmem_to_hbm [thread:$0]  %s447, 128, %s449, %s434
        $region64: #{tpu_custom_call.1} parent=39 // pred_fallthru
          _
      $region40: #{tpu_custom_call.1} parent=5 // pred_fallthru
        _
      %p452 = scmp.le.s32.totalorder 2, %s19
      // Predicated region
      $region65: #{tpu_custom_call.1} parent=5 // pred_check
        %p453 = pneg %p452
      $region66: #{tpu_custom_call.1} parent=5 // pred_check_branch
        %455 = sbr.rel (%p453) target = $region68
      $region67: #{tpu_custom_call.1} parent=5 // pred_region
        %s456 = ssub.s32 %s19, 2
        // Predicated region
        $region69: #{tpu_custom_call.1} parent=67 // pred_check
          %p457 = pneg %p158
        $region70: #{tpu_custom_call.1} parent=67 // pred_check_branch
          %459 = sbr.rel (%p457) target = $region72
        $region71: #{tpu_custom_call.1} parent=67 // pred_region
          %s460 = sand.u32 %s143, 1
          %s461 = scalar_lea.sflag [#allocation4], %s460
          %s462 = sand.u32 %s143, 1
          %s463 = smul.addr %s462, 8
          %s464 = scalar_lea.vmem [#allocation11], %s463
          %466 = dma.done %s461, 128
        $region72: #{tpu_custom_call.1} parent=67 // pred_fallthru
          _
      $region68: #{tpu_custom_call.1} parent=5 // pred_fallthru
        _
    $region6: #{tpu_custom_call.1} parent=1 // loop_footer
      %s23 = sadd.s32 1, %s19
    $region7: #{tpu_custom_call.1} parent=1 // loop_footer_branch
      %18 = sbr.rel target = $region3
    $region8: #{tpu_custom_call.1} parent=1 // loop_exit
      _
    %467 = vsyncpa [#allocation3], 1
    %s468 = scalar_lea.sflag [#allocation3], 1
    %469 = vsyncpa %s468, 1
    %470 = vsyncpa [#allocation6], 1
    %471 = vsyncpa [#allocation9], 1
    %472 = vsyncpa [#allocation4], 1
    %s473 = scalar_lea.sflag [#allocation4], 1
    %474 = vsyncpa %s473, 1

</llo_original>
